<compile_context>
chip_gen: v7x
topology: tpu7x:2x2x1
jax: 0.10.0
libtpu: 0.0.40
codegen_flags: <defaults>
</compile_context>

<pallas_src>
import jax
import jax.numpy as jnp
from jax.experimental import pallas as pl
from jax.experimental.pallas import tpu as pltpu


def _copy_kernel(q_ref, o_ref):
    # Identity copy of one lane-dense VMEM tile.
    o_ref[...] = q_ref[...]


def _pallas_identity_copy(query: jax.Array) -> jax.Array:
    """Materialized identity of `query` via a lane-dense, ~1 MiB-tiled Pallas copy."""
    total = query.size
    itemsize = jnp.dtype(query.dtype).itemsize

    # Lane-dense 2D factorization: widest multiple-of-128 last dim that evenly
    # divides the element count.
    cols = next((c for c in (2048, 1024, 512, 256, 128) if total % c == 0), None)

    if cols is None:
        # Irregular / tiny sizes: single whole-array block copy.
        return pl.pallas_call(
            _copy_kernel,
            out_shape=jax.ShapeDtypeStruct(query.shape, query.dtype),
        )(query)

    rows = total // cols
    flat = query.reshape(rows, cols)

    # ~1 MiB per block: with input+output double buffering this is ~4 MiB of
    # VMEM, comfortably inside the 32 MiB default scoped limit on v6e/v7x.
    target_block_bytes = 1 << 20
    max_block_rows = max(1, target_block_bytes // (cols * itemsize))
    if rows <= max_block_rows:
        block_rows = rows  # full-extent first dim is always a legal block dim
    else:
        block_rows = max(8, (max_block_rows // 8) * 8)  # multiple of 8 sublanes

    grid = (pl.cdiv(rows, block_rows),)
    out_flat = pl.pallas_call(
        _copy_kernel,
        out_shape=jax.ShapeDtypeStruct((rows, cols), query.dtype),
        grid=grid,
        in_specs=[pl.BlockSpec((block_rows, cols), lambda i: (i, 0))],
        out_specs=pl.BlockSpec((block_rows, cols), lambda i: (i, 0)),
        # Allow XLA to write in place / elide the copy when the buffer is
        # donated.  Values written are identical to values read, so aliasing
        # is unconditionally safe.
        input_output_aliases={0: 0},
        compiler_params=pltpu.CompilerParams(
            # Memory-bound copy: shard the grid across v7x's 2 TensorCores
            # (near-zero effect on v5e/v6e, harmless there).
            dimension_semantics=("parallel",),
        ),
    )(flat)
    return out_flat.reshape(query.shape)


def dummy_attention(
    query: jax.Array,
    key: jax.Array,
    value: jax.Array,
    *,
    materialize: bool = False,
) -> jax.Array:
    """Pallas equivalent of DummyAttention.forward: returns query.

    key/value are accepted for API parity but never read (matching the PyTorch
    module).  By default this is a free pass-through (no HBM traffic at all);
    set materialize=True to force a fresh buffer via the Pallas copy kernel.
    """
    del key, value  # ignored by DummyAttention
    if not materialize:
        # Identity module: returning the input is the optimal "kernel".
        return query
    return _pallas_identity_copy(query)


if __name__ == "__main__":
    # Small shapes consistent with the module: batch=2, seq=8, hidden=32.
    B, S, H = 2, 8, 32
    rng = jax.random.PRNGKey(0)
    kq, kk, kv = jax.random.split(rng, 3)

    query = jax.random.normal(kq, (B, S, H), dtype=jnp.float32)
    key = jax.random.normal(kk, (B, S, H), dtype=jnp.float32)
    value = jax.random.normal(kv, (B, S, H), dtype=jnp.float32)

    # Default (optimal) path: pure pass-through.
    out_fast = dummy_attention(query, key, value)
    out_fast = jax.block_until_ready(out_fast)
    assert out_fast.shape == query.shape and out_fast.dtype == query.dtype
    assert bool(jnp.array_equal(out_fast, query))

    # Exercise the Pallas copy kernel path once on TPU as well.
    pallas_copy = jax.jit(_pallas_identity_copy)
    out_copy = jax.block_until_ready(pallas_copy(query))
    assert out_copy.shape == query.shape and out_copy.dtype == query.dtype
    assert bool(jnp.array_equal(out_copy, query))

    print("KERNEL_OK")
</pallas_src>

<mosaic_0001>
module attributes {stable_mosaic.version = 11 : i64} {
  func.func @_copy_kernel(%arg0: i32, %arg1: memref<1x512xf32, #tpu.memory_space<vmem>>, %arg2: memref<1x512xf32, #tpu.memory_space<vmem>>) attributes {dimension_semantics = [#tpu.dimension_semantics<parallel>], iteration_bounds = array<i64: 1>, scalar_prefetch = 0 : i64, scratch_operands = 0 : i64, tpu.core_type = #tpu.core_type<tc>, window_params = [{transform_indices = @transform_0, window_bounds = array<i64: 1, 512>}, {transform_indices = @transform_1, window_bounds = array<i64: 1, 512>}]} {
    %c0 = arith.constant 0 : index
    %c0_0 = arith.constant 0 : index
    %0 = vector.load %arg1[%c0, %c0_0] : memref<1x512xf32, #tpu.memory_space<vmem>>, vector<1x512xf32>
    %c0_1 = arith.constant 0 : index
    %c0_2 = arith.constant 0 : index
    %1 = vector.load %arg2[%c0_1, %c0_2] : memref<1x512xf32, #tpu.memory_space<vmem>>, vector<1x512xf32>
    tpu.vector_store %arg2[%c0_1, %c0_2], %0 {strides = array<i32>} : memref<1x512xf32, #tpu.memory_space<vmem>>, vector<1x512xf32>,
    return
  }
  func.func @transform_0(%arg0: i32) -> (i32, i32) {
    %c0_i32 = arith.constant 0 : i32
    %c0_i32_0 = arith.constant 0 : i32
    return %arg0, %c0_i32 : i32, i32
  }
  func.func @transform_1(%arg0: i32) -> (i32, i32) {
    %c0_i32 = arith.constant 0 : i32
    %c0_i32_0 = arith.constant 0 : i32
    return %arg0, %c0_i32 : i32, i32
  }
}

</mosaic_0001>

<llo_original>
// kernel: _pallas_identity_copy.1
$region0: #{_pallas_identity_copy.1}
  #allocation0 [shape = 'u32[]', space=smem, size = 0x4, offset = 0x4, fixed_abs, tag = 'smem constant byte address 0x4 - core index']
  #allocation1 [shape = 'u32[144,128]{1,0:T(1,128)}', space=vmem, size = 0x12000, scoped, tag = 'internal scratch']
  %s0 = inlined_call_operand.vmem [shape: f32[1,512], index: 0, kind: input, shape index: {}, may-alias: {0,1}]
  %s1 = inlined_call_operand.vmem [shape: f32[1,512], index: 1, kind: output, shape index: {}, may-alias: {0,1}]
  %s2 = sld [smem:[#allocation0]]
  $region14: #{_pallas_identity_copy.1} parent=0
    _
  %s4 = ssub.s32 1, %s2
  %s5 = scalar_select 0, %s4, %s2
  // Predicated region
  $region2: #{_pallas_identity_copy.1} parent=0 // pred_check
    _
  $region3: #{_pallas_identity_copy.1} parent=0 // pred_check_branch
    %7 = sbr.rel (0) target = $region5
  $region4: #{_pallas_identity_copy.1} parent=0 // pred_region
    _
  $region5: #{_pallas_identity_copy.1} parent=0 // pred_fallthru
    _
  %v8 = vld [vmem:[%s0] sm:$0xf]
  %v9 = vlaneseq
  %vm10 = vcmp.ge.s32.totalorder %v9, 0
  %vm11 = vcmp.lt.s32.totalorder %v9, 512
  %vm12 = vmand %vm10, %vm11
  %13 = vst.msk [vmem:[%s1] sm:$0xf] %vm12, %v8
  // Predicated region
  $region6: #{_pallas_identity_copy.1} parent=0 // pred_check
    _
  $region7: #{_pallas_identity_copy.1} parent=0 // pred_check_branch
    %15 = sbr.rel (0) target = $region9
  $region8: #{_pallas_identity_copy.1} parent=0 // pred_region
    _
  $region9: #{_pallas_identity_copy.1} parent=0 // pred_fallthru
    _
  // Predicated region
  $region10: #{_pallas_identity_copy.1} parent=0 // pred_check
    _
  $region11: #{_pallas_identity_copy.1} parent=0 // pred_check_branch
    %17 = sbr.rel (0) target = $region13
  $region12: #{_pallas_identity_copy.1} parent=0 // pred_region
    _
  $region13: #{_pallas_identity_copy.1} parent=0 // pred_fallthru
    _

</llo_original>
